<compile_context>
chip_gen: v7x
topology: tpu7x:2x2x1
jax: 0.10.0
libtpu: 0.0.40
codegen_flags: <defaults>
</compile_context>

<pallas_src>
import functools

import jax
import jax.numpy as jnp
from jax.experimental import pallas as pl
from jax.experimental.pallas import tpu as pltpu


_VMEM_STREAM_BUDGET = 32 * 1024 * 1024   # x/y blocks, double buffered
_VMEM_LIMIT_CAP = 48 * 1024 * 1024       # stay well under v7x's 64 MiB VMEM
_PALLAS_MIN_ROWS = 1024                  # below this, XLA fusion wins


# ---------------- single-axis kernels (full D row per block) ----------------
def _margin_kernel(x_ref, y_ref, lab_ref, o_ref, *, margin):
    # x_ref, y_ref: (tn, D) storage dtype; lab_ref, o_ref: (tn, 1) f32.
    x = x_ref[...].astype(jnp.float32)
    y = y_ref[...].astype(jnp.float32)
    d = x - y
    dist = jnp.sum(d * d, axis=-1, keepdims=True)         # squared euclidean
    o_ref[...] = jnp.maximum(margin - lab_ref[...] * (1.0 - dist), 0.0)


def _hamming_kernel(x_ref, y_ref, lab_ref, o_ref, *, d_scale, coef):
    # 0.25*(lab - mean(tanh x * tanh y))^2 == coef*(lab*D - sum(tanh x*tanh y))^2
    # with coef = 0.25 / D^2 (folds the 1/D of the mean and the 0.25 into one
    # post-reduction constant).
    tx = jnp.tanh(x_ref[...].astype(jnp.float32))
    ty = jnp.tanh(y_ref[...].astype(jnp.float32))
    s = jnp.sum(tx * ty, axis=-1, keepdims=True)           # (tn, 1)
    diff = lab_ref[...] * d_scale - s
    o_ref[...] = coef * (diff * diff)


# ---------------- D-split kernels (accumulate over 128-aligned D tiles) -----
def _margin_kernel_split(x_ref, y_ref, lab_ref, o_ref, acc_ref, *,
                         margin, d_total, td, needs_mask):
    k = pl.program_id(1)

    @pl.when(k == 0)
    def _():
        acc_ref[...] = jnp.zeros_like(acc_ref)

    x = x_ref[...].astype(jnp.float32)
    y = y_ref[...].astype(jnp.float32)
    d = x - y
    sq = d * d
    if needs_mask:  # ragged last D chunk: zero out padded lanes
        col = k * td + jax.lax.broadcasted_iota(jnp.int32, sq.shape, 1)
        sq = jnp.where(col < d_total, sq, 0.0)
    acc_ref[...] += jnp.sum(sq, axis=-1, keepdims=True)

    @pl.when(k == pl.num_programs(1) - 1)
    def _():
        o_ref[...] = jnp.maximum(
            margin - lab_ref[...] * (1.0 - acc_ref[...]), 0.0)


def _hamming_kernel_split(x_ref, y_ref, lab_ref, o_ref, acc_ref, *,
                          d_scale, coef, d_total, td, needs_mask):
    k = pl.program_id(1)

    @pl.when(k == 0)
    def _():
        acc_ref[...] = jnp.zeros_like(acc_ref)

    tx = jnp.tanh(x_ref[...].astype(jnp.float32))
    ty = jnp.tanh(y_ref[...].astype(jnp.float32))
    prod = tx * ty
    if needs_mask:
        col = k * td + jax.lax.broadcasted_iota(jnp.int32, prod.shape, 1)
        prod = jnp.where(col < d_total, prod, 0.0)
    acc_ref[...] += jnp.sum(prod, axis=-1, keepdims=True)

    @pl.when(k == pl.num_programs(1) - 1)
    def _():
        diff = lab_ref[...] * d_scale - acc_ref[...]
        o_ref[...] = coef * (diff * diff)


# ---------------- tiling heuristics -----------------------------------------
def _choose_tn(n, d, itemsize, budget_bytes):
    """Largest row tile whose double-buffered x/y blocks fit the VMEM budget,
    kept a multiple of 8 (sublane) and small enough that the grid has >= 2
    steps (so v7x can shard across both TensorCores)."""
    per_row = 2 * 2 * d * itemsize            # x & y, 2 pipeline buffers each
    tn = int(budget_bytes // max(per_row, 1))
    tn = max(8, min(tn, 2048))                # >=512 rows hits ~85% of roofline
    if tn >= n:
        if n < 16:
            return n                          # single full block
        tn = -(-n // 2)                       # ceil(n/2): keep grid length 2
        tn = -(-tn // 8) * 8                  # round up to sublane multiple
    else:
        tn = max(8, (tn // 8) * 8)
    return tn


def _choose_tiles(n, d, itemsize, budget_bytes):
    """Pick (tn, td).  Full-D row tiles when even an (8, D) pair fits;
    otherwise split D into 128-lane-aligned chunks and accumulate in VMEM."""
    if 8 * 2 * 2 * d * itemsize <= budget_bytes:
        return _choose_tn(n, d, itemsize, budget_bytes), d
    td = (budget_bytes // (2 * 2 * 8 * itemsize)) // 128 * 128
    td = max(128, min(td, pl.cdiv(d, 128) * 128))
    return 8, td


# ---------------- reference (pure-JAX, also the small-N fallback) -----------
def _ref_pairwise_loss(x, y, labels, *, loss_type="margin", margin=1.0):
    labels = labels.astype(jnp.float32)
    x = x.astype(jnp.float32)
    y = y.astype(jnp.float32)
    if loss_type == "margin":
        dist = jnp.sum((x - y) ** 2, axis=-1)
        return jnp.maximum(margin - labels * (1.0 - dist), 0.0)
    elif loss_type == "hamming":
        sim = jnp.mean(jnp.tanh(x) * jnp.tanh(y), axis=1)
        return 0.25 * (labels - sim) ** 2
    raise ValueError("Unknown loss_type %s" % loss_type)


# ---------------- public wrapper ---------------------------------------------
def pairwise_loss(x, y, labels, *, loss_type="margin", margin=1.0,
                  tn=None, td=None, use_pallas=None):
    """Pallas implementation of PairwiseLoss.forward.

    x, y:     [N, D] float (f32 / bf16 / fp16; streamed in storage dtype)
    labels:   [N] int (values in {-1, +1})
    returns:  [N] float32 loss per pair
    """
    assert x.shape == y.shape and x.ndim == 2
    N, D = x.shape
    assert labels.shape == (N,)
    if loss_type not in ("margin", "hamming"):
        raise ValueError("Unknown loss_type %s" % loss_type)

    if use_pallas is None:
        use_pallas = N >= _PALLAS_MIN_ROWS
    if not use_pallas:
        # Small problems: kernel launch + per-step overhead dwarfs the work;
        # let XLA fuse the elementwise + reduction.
        return _ref_pairwise_loss(x, y, labels, loss_type=loss_type,
                                  margin=margin)

    # Keep x/y in their storage dtype (bf16/fp16/f32): the kernel casts to f32
    # after the load, so HBM traffic stays at the input width.
    lab = labels.astype(jnp.float32).reshape(N, 1)
    itemsize = max(jnp.dtype(x.dtype).itemsize, jnp.dtype(y.dtype).itemsize)

    if td is None:
        tn_auto, td = _choose_tiles(N, D, itemsize, _VMEM_STREAM_BUDGET)
        if tn is None:
            tn = tn_auto
    elif tn is None:
        tn = _choose_tn(N, min(td, D), itemsize, _VMEM_STREAM_BUDGET)

    split = td < D
    grid_rows = pl.cdiv(N, tn)

    if not split:
        block_d = D
        if loss_type == "margin":
            kernel = functools.partial(_margin_kernel, margin=float(margin))
        else:
            kernel = functools.partial(_hamming_kernel, d_scale=float(D),
                                       coef=0.25 / float(D) ** 2)
        grid = (grid_rows,)
        in_specs = [
            pl.BlockSpec((tn, D), lambda i: (i, 0)),
            pl.BlockSpec((tn, D), lambda i: (i, 0)),
            pl.BlockSpec((tn, 1), lambda i: (i, 0)),
        ]
        out_specs = pl.BlockSpec((tn, 1), lambda i: (i, 0))
        scratch_shapes = ()
        semantics = ("parallel",)
    else:
        block_d = td
        needs_mask = (D % td) != 0
        if loss_type == "margin":
            kernel = functools.partial(_margin_kernel_split,
                                       margin=float(margin), d_total=D,
                                       td=td, needs_mask=needs_mask)
        else:
            kernel = functools.partial(_hamming_kernel_split,
                                       d_scale=float(D),
                                       coef=0.25 / float(D) ** 2,
                                       d_total=D, td=td,
                                       needs_mask=needs_mask)
        # Reduction (D) axis last in the grid; row axis stays "parallel".
        grid = (grid_rows, pl.cdiv(D, td))
        in_specs = [
            pl.BlockSpec((tn, td), lambda i, k: (i, k)),
            pl.BlockSpec((tn, td), lambda i, k: (i, k)),
            pl.BlockSpec((tn, 1), lambda i, k: (i, 0)),
        ]
        out_specs = pl.BlockSpec((tn, 1), lambda i, k: (i, 0))
        scratch_shapes = [pltpu.VMEM((tn, 1), jnp.float32)]
        semantics = ("parallel", "arbitrary")

    # Double-buffered x/y blocks + (tiny) labels/output/scratch, plus headroom.
    vmem_needed = (2 * 2 * tn * block_d * itemsize
                   + 2 * 2 * tn * 4 * 2          # labels + output blocks
                   + tn * 128 * 4)               # scratch (lane-padded)
    vmem_limit = int(min(max(vmem_needed + (2 << 20), 16 << 20),
                         _VMEM_LIMIT_CAP))

    out = pl.pallas_call(
        kernel,
        out_shape=jax.ShapeDtypeStruct((N, 1), jnp.float32),
        grid_spec=pltpu.PrefetchScalarGridSpec(
            num_scalar_prefetch=0,
            grid=grid,
            in_specs=in_specs,
            out_specs=out_specs,
            scratch_shapes=scratch_shapes,
        ),
        compiler_params=pltpu.CompilerParams(
            dimension_semantics=semantics,
            vmem_limit_bytes=vmem_limit),
    )(x, y, lab)
    return out[:, 0]


if __name__ == "__main__":
    key = jax.random.PRNGKey(0)
    kx, ky, kl = jax.random.split(key, 3)

    failures = []

    def check(name, out, ref, atol=1e-4, rtol=1e-4):
        if not jnp.allclose(out, ref, atol=atol, rtol=rtol):
            failures.append((name, float(jnp.max(jnp.abs(out - ref)))))

    # --- Pallas path: small [N, D] pairs, f32 and bf16 inputs ---------------
    N, D = 16, 64
    xf = jax.random.normal(kx, (N, D), dtype=jnp.float32)
    yf = jax.random.normal(ky, (N, D), dtype=jnp.float32)
    labels = jax.random.bernoulli(kl, 0.5, (N,)).astype(jnp.int32) * 2 - 1
    xb, yb = xf.astype(jnp.bfloat16), yf.astype(jnp.bfloat16)

    for loss_type in ("margin", "hamming"):
        for tag, (xx, yy) in (("f32", (xf, yf)), ("bf16", (xb, yb))):
            out = jax.block_until_ready(
                pairwise_loss(xx, yy, labels, loss_type=loss_type,
                              margin=1.0, use_pallas=True))
            ref = _ref_pairwise_loss(xx, yy, labels, loss_type=loss_type,
                                     margin=1.0)
            check(f"{loss_type}/{tag}", out, ref)

    # --- Pallas path: forced D-split (accumulator + ragged last chunk) ------
    N2, D2 = 16, 192
    x2 = jax.random.normal(kx, (N2, D2), dtype=jnp.float32)
    y2 = jax.random.normal(ky, (N2, D2), dtype=jnp.float32)
    lab2 = jax.random.bernoulli(kl, 0.5, (N2,)).astype(jnp.int32) * 2 - 1
    for loss_type in ("margin", "hamming"):
        out = jax.block_until_ready(
            pairwise_loss(x2, y2, lab2, loss_type=loss_type, margin=1.0,
                          td=128, use_pallas=True))
        ref = _ref_pairwise_loss(x2, y2, lab2, loss_type=loss_type, margin=1.0)
        check(f"split/{loss_type}", out, ref)

    # --- auto dispatch: small N routes to the fused pure-JAX fallback -------
    out = jax.block_until_ready(
        pairwise_loss(xf, yf, labels, loss_type="margin", margin=1.0))
    check("fallback/margin", out,
          _ref_pairwise_loss(xf, yf, labels, loss_type="margin", margin=1.0),
          atol=1e-6, rtol=1e-6)

    if failures:
        for name, err in failures:
            print(f"MISMATCH {name}: max abs err {err}")
    else:
        print("KERNEL_OK")
</pallas_src>

<mosaic_0001>
module attributes {stable_mosaic.version = 11 : i64} {
  func.func @_margin_kernel(%arg0: i32, %arg1: memref<8x64xf32, #tpu.memory_space<vmem>>, %arg2: memref<8x64xf32, #tpu.memory_space<vmem>>, %arg3: memref<8x1xf32, #tpu.memory_space<vmem>>, %arg4: memref<8x1xf32, #tpu.memory_space<vmem>>) attributes {dimension_semantics = [#tpu.dimension_semantics<parallel>], iteration_bounds = array<i64: 2>, scalar_prefetch = 0 : i64, scratch_operands = 0 : i64, tpu.core_type = #tpu.core_type<tc>, window_params = [{transform_indices = @transform_0, window_bounds = array<i64: 8, 64>}, {transform_indices = @transform_1, window_bounds = array<i64: 8, 64>}, {transform_indices = @transform_2, window_bounds = array<i64: 8, 1>}, {transform_indices = @transform_3, window_bounds = array<i64: 8, 1>}]} {
    %c0 = arith.constant 0 : index
    %c0_0 = arith.constant 0 : index
    %0 = vector.load %arg1[%c0, %c0_0] : memref<8x64xf32, #tpu.memory_space<vmem>>, vector<8x64xf32>
    %c0_1 = arith.constant 0 : index
    %c0_2 = arith.constant 0 : index
    %1 = vector.load %arg2[%c0_1, %c0_2] : memref<8x64xf32, #tpu.memory_space<vmem>>, vector<8x64xf32>
    %2 = arith.subf %0, %1 : vector<8x64xf32>
    %3 = arith.mulf %2, %2 : vector<8x64xf32>
    %cst = arith.constant dense<0.000000e+00> : vector<8xf32>
    %4 = vector.multi_reduction <add>, %3, %cst [1] : vector<8x64xf32> to vector<8xf32>
    %5 = vector.shape_cast %4 : vector<8xf32> to vector<8x1xf32>
    %c0_3 = arith.constant 0 : index
    %c0_4 = arith.constant 0 : index
    %6 = vector.load %arg3[%c0_3, %c0_4] : memref<8x1xf32, #tpu.memory_space<vmem>>, vector<8x1xf32>
    %cst_5 = arith.constant 1.000000e+00 : f32
    %7 = vector.broadcast %cst_5 : f32 to vector<8x1xf32>
    %8 = arith.subf %7, %5 : vector<8x1xf32>
    %9 = arith.mulf %6, %8 : vector<8x1xf32>
    %cst_6 = arith.constant 1.000000e+00 : f32
    %10 = vector.broadcast %cst_6 : f32 to vector<8x1xf32>
    %11 = arith.subf %10, %9 : vector<8x1xf32>
    %cst_7 = arith.constant 0.000000e+00 : f32
    %12 = vector.broadcast %cst_7 : f32 to vector<8x1xf32>
    %13 = arith.maximumf %11, %12 : vector<8x1xf32>
    %c0_8 = arith.constant 0 : index
    %c0_9 = arith.constant 0 : index
    %14 = vector.load %arg4[%c0_8, %c0_9] : memref<8x1xf32, #tpu.memory_space<vmem>>, vector<8x1xf32>
    tpu.vector_store %arg4[%c0_8, %c0_9], %13 {strides = array<i32>} : memref<8x1xf32, #tpu.memory_space<vmem>>, vector<8x1xf32>,
    return
  }
  func.func @transform_0(%arg0: i32) -> (i32, i32) {
    %c0_i32 = arith.constant 0 : i32
    %c0_i32_0 = arith.constant 0 : i32
    return %arg0, %c0_i32 : i32, i32
  }
  func.func @transform_1(%arg0: i32) -> (i32, i32) {
    %c0_i32 = arith.constant 0 : i32
    %c0_i32_0 = arith.constant 0 : i32
    return %arg0, %c0_i32 : i32, i32
  }
  func.func @transform_2(%arg0: i32) -> (i32, i32) {
    %c0_i32 = arith.constant 0 : i32
    %c0_i32_0 = arith.constant 0 : i32
    return %arg0, %c0_i32 : i32, i32
  }
  func.func @transform_3(%arg0: i32) -> (i32, i32) {
    %c0_i32 = arith.constant 0 : i32
    %c0_i32_0 = arith.constant 0 : i32
    return %arg0, %c0_i32 : i32, i32
  }
}

</mosaic_0001>

<llo_original>
// kernel: tpu_custom_call.1
$region0: #{tpu_custom_call.1}
  #allocation0 [shape = 'u32[]', space=smem, size = 0x4, offset = 0x4, fixed_abs, tag = 'smem constant byte address 0x4 - core index']
  #allocation1 [shape = 'u32[144,128]{1,0:T(1,128)}', space=vmem, size = 0x12000, scoped, tag = 'internal scratch']
  %s0 = inlined_call_operand.vmem [shape: f32[16,64], index: 0, kind: input, shape index: {}]
  %s1 = inlined_call_operand.hbm [shape: f32[16,64], index: 1, kind: input, shape index: {}]
  %s2 = inlined_call_operand.vmem [shape: f32[16,1], index: 2, kind: input, shape index: {}]
  %s3 = inlined_call_operand.vmem [shape: f32[16,1], index: 3, kind: output, shape index: {}]
  %s4 = sld [smem:[#allocation0]]
  $region49: #{tpu_custom_call.1} parent=0
    _
  %s6 = ssub.s32 1, %s4
  %s7 = scalar_select 0, %s6, %s4
  $region1: #{tpu_custom_call.1} parent=0
    #allocation2 [shape = 'u8[8192]{0}', space=vmem, size = 0x2000, scoped, tag = 'input window, operand 1']
    #allocation3 [shape = 's32[2]{0}', space=sflag, size = 0x8, scoped, tag = 'scoped memory for tpu_custom_call.1']
    %8 = vsyncpa [#allocation3], 0
    %s9 = scalar_lea.sflag [#allocation3], 1
    %10 = vsyncpa %s9, 0
    loop: start=0, step=1, limit=4
    $region2: #{tpu_custom_call.1} parent=1 // loop_pre_header
      _
    $region3: #{tpu_custom_call.1} parent=1 // loop_header
      %s12 = sphi 0, %s16
      %p13 = scmp.ge.s32.totalorder %s12, 4
      %s22 = sphi 0, %s24
      %s25 = sphi 0, %s22
      %s26 = sphi 0, %s25
      %s42 = sphi 0, %s26
      %s48 = sphi 0, %s50
      %s51 = sphi 0, %s48
      %s52 = sphi 0, %s51
      %s68 = sphi 0, %s52
      %s74 = sphi 0, %s76
      %s77 = sphi 0, %s74
      %s78 = sphi 0, %s77
      %s94 = sphi 0, %s78
      %s100 = sphi 0, %s102
      %s103 = sphi 0, %s100
      %s104 = sphi 0, %s103
      %s120 = sphi 0, %s104
    $region4: #{tpu_custom_call.1} parent=1 // loop_header_branch
      %15 = sbr.rel (%p13) target = $region8
    $region5: #{tpu_custom_call.1} parent=1 // loop_body
      %s17 = ssub.s32 %s12, 1
      %s18 = ssub.s32 %s12, 2
      %s19 = sadd.s32 %s12, 1
      %s20 = ssub.s32 %s12, %s19
      %p21 = scmp.eq.s32.totalorder %s20, 0
      %s23 = sadd.s32 %s22, 1
      %s24 = scalar_select %p21, %s22, %s23
      %p27 = pneg %p21
      %p28 = scmp.eq.s32.totalorder %s12, 1
      %p29 = por %p27, %p28
      %p30 = scmp.ne.s32.totalorder %s22, %s25
      %p31 = scmp.eq.s32.totalorder %s12, 0
      %p32 = por %p30, %p31
      %p33 = scmp.ne.s32.totalorder %s22, %s25
      %p34 = scmp.eq.s32.totalorder %s17, 1
      %p35 = por %p33, %p34
      %p36 = scmp.ne.s32.totalorder %s25, %s26
      %p37 = scmp.eq.s32.totalorder %s17, 0
      %p38 = por %p36, %p37
      %p39 = scmp.ne.s32.totalorder %s25, %s26
      %p40 = scmp.eq.s32.totalorder %s18, 1
      %p41 = por %p39, %p40
      %p43 = scmp.ne.s32.totalorder %s26, %s42
      %p44 = scmp.eq.s32.totalorder %s18, 0
      %p45 = por %p43, %p44
      %s46 = ssub.s32 %s12, %s19
      %p47 = scmp.eq.s32.totalorder %s46, 0
      %s49 = sadd.s32 %s48, 1
      %s50 = scalar_select %p47, %s48, %s49
      %p53 = pneg %p47
      %p54 = scmp.eq.s32.totalorder %s12, 1
      %p55 = por %p53, %p54
      %p56 = scmp.ne.s32.totalorder %s48, %s51
      %p57 = scmp.eq.s32.totalorder %s12, 0
      %p58 = por %p56, %p57
      %p59 = scmp.ne.s32.totalorder %s48, %s51
      %p60 = scmp.eq.s32.totalorder %s17, 1
      %p61 = por %p59, %p60
      %p62 = scmp.ne.s32.totalorder %s51, %s52
      %p63 = scmp.eq.s32.totalorder %s17, 0
      %p64 = por %p62, %p63
      %p65 = scmp.ne.s32.totalorder %s51, %s52
      %p66 = scmp.eq.s32.totalorder %s18, 1
      %p67 = por %p65, %p66
      %p69 = scmp.ne.s32.totalorder %s52, %s68
      %p70 = scmp.eq.s32.totalorder %s18, 0
      %p71 = por %p69, %p70
      %s72 = ssub.s32 %s12, %s19
      %p73 = scmp.eq.s32.totalorder %s72, 0
      %s75 = sadd.s32 %s74, 1
      %s76 = scalar_select %p73, %s74, %s75
      %p79 = pneg %p73
      %p80 = scmp.eq.s32.totalorder %s12, 1
      %p81 = por %p79, %p80
      %p82 = scmp.ne.s32.totalorder %s74, %s77
      %p83 = scmp.eq.s32.totalorder %s12, 0
      %p84 = por %p82, %p83
      %p85 = scmp.ne.s32.totalorder %s74, %s77
      %p86 = scmp.eq.s32.totalorder %s17, 1
      %p87 = por %p85, %p86
      %p88 = scmp.ne.s32.totalorder %s77, %s78
      %p89 = scmp.eq.s32.totalorder %s17, 0
      %p90 = por %p88, %p89
      %p91 = scmp.ne.s32.totalorder %s77, %s78
      %p92 = scmp.eq.s32.totalorder %s18, 1
      %p93 = por %p91, %p92
      %p95 = scmp.ne.s32.totalorder %s78, %s94
      %p96 = scmp.eq.s32.totalorder %s18, 0
      %p97 = por %p95, %p96
      %s98 = ssub.s32 %s12, %s19
      %p99 = scmp.eq.s32.totalorder %s98, 0
      %s101 = sadd.s32 %s100, 1
      %s102 = scalar_select %p99, %s100, %s101
      %p105 = pneg %p99
      %p106 = scmp.eq.s32.totalorder %s12, 1
      %p107 = por %p105, %p106
      %p108 = scmp.ne.s32.totalorder %s100, %s103
      %p109 = scmp.eq.s32.totalorder %s12, 0
      %p110 = por %p108, %p109
      %p111 = scmp.ne.s32.totalorder %s100, %s103
      %p112 = scmp.eq.s32.totalorder %s17, 1
      %p113 = por %p111, %p112
      %p114 = scmp.ne.s32.totalorder %s103, %s104
      %p115 = scmp.eq.s32.totalorder %s17, 0
      %p116 = por %p114, %p115
      %p117 = scmp.ne.s32.totalorder %s103, %s104
      %p118 = scmp.eq.s32.totalorder %s18, 1
      %p119 = por %p117, %p118
      %p121 = scmp.ne.s32.totalorder %s104, %s120
      %p122 = scmp.eq.s32.totalorder %s18, 0
      %p123 = por %p121, %p122
      %p124 = scmp.le.s32.totalorder 1, %s12
      %p125 = scmp.lt.s32.totalorder %s12, 3
      %p126 = pnand %p124, %p125
      %p127 = pneg %p126
      // Predicated region
      $region9: #{tpu_custom_call.1} parent=5 // pred_check
        _
      $region10: #{tpu_custom_call.1} parent=5 // pred_check_branch
        %129 = sbr.rel (%p126) target = $region12
      $region11: #{tpu_custom_call.1} parent=5 // pred_region
        %s130 = ssub.s32 %s12, 1
      $region12: #{tpu_custom_call.1} parent=5 // pred_fallthru
        _
      %p131 = scmp.lt.s32.totalorder %s12, 2
      // Predicated region
      $region13: #{tpu_custom_call.1} parent=5 // pred_check
        %p132 = pneg %p131
      $region14: #{tpu_custom_call.1} parent=5 // pred_check_branch
        %134 = sbr.rel (%p132) target = $region16
      $region15: #{tpu_custom_call.1} parent=5 // pred_region
        // Predicated region
        $region17: #{tpu_custom_call.1} parent=15 // pred_check
          %p135 = pneg %p32
        $region18: #{tpu_custom_call.1} parent=15 // pred_check_branch
          %137 = sbr.rel (%p135) target = $region20
        $region19: #{tpu_custom_call.1} parent=15 // pred_region
          %p138 = scmp.lt.s32.totalorder %s12, 1
          %s139 = scalar_select %p138, %s12, 1
          %s140 = smul.addr %s139, 8
          %s141 = scalar_lea.vmem %s0, %s140
        $region20: #{tpu_custom_call.1} parent=15 // pred_fallthru
          _
        // Predicated region
        $region21: #{tpu_custom_call.1} parent=15 // pred_check
          %p142 = pneg %p58
        $region22: #{tpu_custom_call.1} parent=15 // pred_check_branch
          %144 = sbr.rel (%p142) target = $region24
        $region23: #{tpu_custom_call.1} parent=15 // pred_region
          %s145 = sand.u32 %s48, 1
          %s146 = scalar_lea.sflag [#allocation3], %s145
          %s147 = sand.u32 %s48, 1
          %s148 = smul.addr %s147, 8
          %s149 = scalar_lea.vmem [#allocation2], %s148
          %s151 = ssub.s32 128, 128
          %152 = vsyncadd %s146, %s151
          %s153 = smul.addr %s12, 128
          %s154 = scalar_lea.hbm %s1, %s153
          %s156 = sshll.u32 %s149, 4
          %s157 = int_to_ptr.vmem [resolvable:$true] %s156
          %159 = dma.hbm_to_vmem [thread:$0]  %s154, 128, %s157, %s146
        $region24: #{tpu_custom_call.1} parent=15 // pred_fallthru
          _
        // Predicated region
        $region25: #{tpu_custom_call.1} parent=15 // pred_check
          %p160 = pneg %p84
        $region26: #{tpu_custom_call.1} parent=15 // pred_check_branch
          %162 = sbr.rel (%p160) target = $region28
        $region27: #{tpu_custom_call.1} parent=15 // pred_region
          %p163 = scmp.lt.s32.totalorder %s12, 1
          %s164 = scalar_select %p163, %s12, 1
          %s165 = smul.addr %s164, 8
          %s166 = scalar_lea.vmem %s2, %s165
        $region28: #{tpu_custom_call.1} parent=15 // pred_fallthru
          _
      $region16: #{tpu_custom_call.1} parent=5 // pred_fallthru
        _
      %p167 = scmp.le.s32.totalorder 1, %s12
      %p168 = scmp.lt.s32.totalorder %s12, 3
      %p169 = pnand %p167, %p168
      %p170 = pneg %p169
      // Predicated region
      $region29: #{tpu_custom_call.1} parent=5 // pred_check
        _
      $region30: #{tpu_custom_call.1} parent=5 // pred_check_branch
        %172 = sbr.rel (%p169) target = $region32
      $region31: #{tpu_custom_call.1} parent=5 // pred_region
        %s173 = ssub.s32 %s12, 1
        %s174 = sand.u32 %s51, 1
        %s175 = scalar_lea.sflag [#allocation3], %s174
        %s176 = sand.u32 %s51, 1
        %s177 = smul.addr %s176, 8
        %s178 = scalar_lea.vmem [#allocation2], %s177
        // Predicated region
        $region33: #{tpu_custom_call.1} parent=31 // pred_check
          %p179 = pneg %p64
        $region34: #{tpu_custom_call.1} parent=31 // pred_check_branch
          %181 = sbr.rel (%p179) target = $region36
        $region35: #{tpu_custom_call.1} parent=31 // pred_region
          %182 = dma.done %s175, 128
        $region36: #{tpu_custom_call.1} parent=31 // pred_fallthru
          _
        %p183 = scmp.lt.s32.totalorder %s17, 1
        %s184 = scalar_select %p183, %s17, 1
        %s185 = smul.addr %s184, 8
        %s186 = scalar_lea.vmem %s0, %s185
        %p187 = pneg %p38
        %p188 = pneg %p35
        %s189 = sand.u32 %s51, 1
        %s190 = scalar_lea.sflag [#allocation3], %s189
        %s191 = sand.u32 %s51, 1
        %s192 = smul.addr %s191, 8
        %s193 = scalar_lea.vmem [#allocation2], %s192
        %p194 = pneg %p64
        %p195 = pneg %p61
        %p196 = scmp.lt.s32.totalorder %s17, 1
        %s197 = scalar_select %p196, %s17, 1
        %s198 = smul.addr %s197, 8
        %s199 = scalar_lea.vmem %s2, %s198
        %p200 = pneg %p90
        %p201 = pneg %p87
        %p202 = pneg %p116
        %p203 = pneg %p113
        %p204 = scmp.lt.s32.totalorder %s17, 1
        %s205 = scalar_select %p204, %s17, 1
        %s206 = smul.addr %s205, 8
        %s207 = scalar_lea.vmem %s3, %s206
        %p208 = scmp.lt.s32.totalorder %s17, 1
        %s209 = scalar_select %p208, %s17, 1
        %s210 = smul.addr %s209, 8
        %s211 = scalar_lea.vmem %s0, %s210
        %p212 = scmp.lt.s32.totalorder %s17, 1
        %s213 = scalar_select %p212, %s17, 1
        %s214 = smul.addr %s213, 8
        %s215 = scalar_lea.vmem %s2, %s214
        %p216 = scmp.lt.s32.totalorder %s17, 1
        %s217 = scalar_select %p216, %s17, 1
        %s218 = smul.addr %s217, 8
        %s219 = scalar_lea.vmem %s3, %s218
        %v220 = vld [vmem:[%s211] sm:$0xff]
        %v221 = vld [vmem:[%s178] sm:$0xff]
        %v222 = vsub.f32 %v220, %v221
        %v223 = vmul.f32 %v222, %v222
        %vm224 = vcmask 523264
        %v225 = vsel %vm224, %v223, 0.0
        %226 = vadd.xlane.f32.xlu0 %v225
        %v227 = vpop.xlane.xlu0 %226
        %v228 = vld [vmem:[%s215] sm:$0xff]
        %v229 = vsub.f32 1.0, %v227
        %v230 = vmul.f32 %v228, %v229
        %v231 = vsub.f32 1.0, %v230
        %v232 = vmax.f32 %v231, 0.0
        %vm233 = vcmask 7168
        %234 = vst.msk [vmem:[%s219] sm:$0xff] %vm233, %v232
        %p235 = scmp.lt.s32.totalorder %s17, 1
        %s236 = scalar_select %p235, %s17, 1
        %s237 = smul.addr %s236, 8
        %s238 = scalar_lea.vmem %s3, %s237
        // Predicated region
        $region37: #{tpu_custom_call.1} parent=31 // pred_check
          %p239 = pneg %p113
        $region38: #{tpu_custom_call.1} parent=31 // pred_check_branch
          %241 = sbr.rel (%p239) target = $region40
        $region39: #{tpu_custom_call.1} parent=31 // pred_region
          _
        $region40: #{tpu_custom_call.1} parent=31 // pred_fallthru
          _
      $region32: #{tpu_custom_call.1} parent=5 // pred_fallthru
        _
      %p242 = scmp.le.s32.totalorder 2, %s12
      // Predicated region
      $region41: #{tpu_custom_call.1} parent=5 // pred_check
        %p243 = pneg %p242
      $region42: #{tpu_custom_call.1} parent=5 // pred_check_branch
        %245 = sbr.rel (%p243) target = $region44
      $region43: #{tpu_custom_call.1} parent=5 // pred_region
        %s246 = ssub.s32 %s12, 2
        // Predicated region
        $region45: #{tpu_custom_call.1} parent=43 // pred_check
          %p247 = pneg %p119
        $region46: #{tpu_custom_call.1} parent=43 // pred_check_branch
          %249 = sbr.rel (%p247) target = $region48
        $region47: #{tpu_custom_call.1} parent=43 // pred_region
          %p250 = scmp.lt.s32.totalorder %s18, 1
          %s251 = scalar_select %p250, %s18, 1
          %s252 = smul.addr %s251, 8
          %s253 = scalar_lea.vmem %s3, %s252
        $region48: #{tpu_custom_call.1} parent=43 // pred_fallthru
          _
      $region44: #{tpu_custom_call.1} parent=5 // pred_fallthru
        _
    $region6: #{tpu_custom_call.1} parent=1 // loop_footer
      %s16 = sadd.s32 1, %s12
    $region7: #{tpu_custom_call.1} parent=1 // loop_footer_branch
      %11 = sbr.rel target = $region3
    $region8: #{tpu_custom_call.1} parent=1 // loop_exit
      _
    %254 = vsyncpa [#allocation3], 1
    %s255 = scalar_lea.sflag [#allocation3], 1
    %256 = vsyncpa %s255, 1

</llo_original>
